<compile_context>
chip_gen: v7x
topology: tpu7x:2x2x1
jax: 0.10.0
libtpu: 0.0.40
codegen_flags: <defaults>
</compile_context>

<pallas_src>
import jax
import jax.numpy as jnp
from jax.experimental import pallas as pl
from jax.experimental.pallas import tpu as pltpu

LANE = 128  # padded hidden lane width (hidden=64 zero-padded to 128)


def qnetwork_kernel(x_ref, w_ref, b_ref, o_ref):
    """relu(x@W1+b1) -> relu(.@W2+b2) -> .@W3+b3 on one (TB, state_size) batch tile.

    w_ref: (3, LANE, LANE) weight slab (W1 in rows :state_size of slab 0), possibly bf16.
    b_ref: (3, LANE) f32 biases.  Accumulation, bias add and ReLU are f32; in the bf16
    path the inter-layer activations are rounded to bf16 before each MXU matmul.
    """
    s = x_ref.shape[1]
    x = x_ref[...].astype(w_ref.dtype)

    h1 = jnp.dot(x, w_ref[0, :s, :], preferred_element_type=jnp.float32)
    h1 = jnp.maximum(h1 + b_ref[0:1, :], 0.0)

    h2 = jnp.dot(h1.astype(w_ref.dtype), w_ref[1], preferred_element_type=jnp.float32)
    h2 = jnp.maximum(h2 + b_ref[1:2, :], 0.0)

    out = jnp.dot(h2.astype(w_ref.dtype), w_ref[2], preferred_element_type=jnp.float32)
    out = out + b_ref[2:3, :]
    # Store only the useful Q-value columns (narrow writeback).
    o_ref[...] = out[:, : o_ref.shape[1]].astype(o_ref.dtype)


def _pack_params(params, weight_dtype):
    """Zero-pad hidden/action dims to 128 lanes; stack W1/W2/W3 into one slab."""
    w1, w2, w3 = params["w1"], params["w2"], params["w3"]
    b1, b2, b3 = (jnp.ravel(params[k]) for k in ("b1", "b2", "b3"))
    s, h = w1.shape            # (state_size, 64)
    a = w3.shape[1]            # action_size
    assert s <= LANE and h <= LANE and a <= LANE

    wslab = jnp.zeros((3, LANE, LANE), jnp.float32)
    wslab = wslab.at[0, :s, :h].set(w1)
    wslab = wslab.at[1, :h, :h].set(w2)
    wslab = wslab.at[2, :h, :a].set(w3)

    bslab = (jnp.zeros((3, LANE), jnp.float32)
             .at[0, :h].set(b1).at[1, :h].set(b2).at[2, :a].set(b3))

    return wslab.astype(weight_dtype), bslab  # biases stay f32 (f32 epilogue everywhere)


def qnetwork_forward(state, params, *, block_rows=2048, weight_dtype=jnp.bfloat16):
    """state: (B, state_size) f32. Returns (B, action_size) f32 Q-values."""
    B, state_size = state.shape
    action_size = params["w3"].shape[1]

    wslab, bslab = _pack_params(params, weight_dtype)

    # Batch tile: sublane-aligned, <= block_rows, and small enough that the grid has at
    # least 2 steps when the batch allows (both TensorCores on v7x get work).
    half = -(-B // 2)
    tb = min(block_rows, max(8, ((half + 7) // 8) * 8))
    Bp = ((B + tb - 1) // tb) * tb
    x = state if Bp == B else jnp.pad(state, ((0, Bp - B), (0, 0)))
    grid = (Bp // tb,)

    flops = 2 * Bp * (state_size * LANE + LANE * LANE + LANE * LANE)
    bytes_accessed = (x.size * x.dtype.itemsize
                      + wslab.size * wslab.dtype.itemsize   # weights resident: counted once
                      + bslab.size * 4
                      + Bp * action_size * 4)               # narrowed output writeback

    out = pl.pallas_call(
        qnetwork_kernel,
        out_shape=jax.ShapeDtypeStruct((Bp, action_size), jnp.float32),
        grid=grid,
        in_specs=[
            pl.BlockSpec((tb, state_size), lambda i: (i, 0)),       # batch-tiled state
            pl.BlockSpec((3, LANE, LANE), lambda i: (0, 0, 0)),     # [W1, W2, W3] slab
            pl.BlockSpec((3, LANE), lambda i: (0, 0)),              # [b1, b2, b3] f32
        ],
        out_specs=pl.BlockSpec((tb, action_size), lambda i: (i, 0)),  # narrow output
        compiler_params=pltpu.CompilerParams(dimension_semantics=("parallel",)),
        cost_estimate=pl.CostEstimate(flops=int(flops), transcendentals=0,
                                      bytes_accessed=int(bytes_accessed)),
    )(x, wslab, bslab)

    return out[:B]


def init_params(key, state_size, action_size):
    """Deterministic init mirroring nn.Linear's default U(-1/sqrt(fan_in), +).

    Weights stored (in_features, out_features), i.e. transpose of nn.Linear.weight,
    so the kernel computes x @ W + b directly.
    """
    def linear(key, fan_in, fan_out):
        kw, kb = jax.random.split(key)
        bound = 1.0 / jnp.sqrt(fan_in)
        w = jax.random.uniform(kw, (fan_in, fan_out), jnp.float32, -bound, bound)
        b = jax.random.uniform(kb, (1, fan_out), jnp.float32, -bound, bound)
        return w, b

    k1, k2, k3 = jax.random.split(key, 3)
    w1, b1 = linear(k1, state_size, 64)
    w2, b2 = linear(k2, 64, 64)
    w3, b3 = linear(k3, 64, action_size)
    return {"w1": w1, "b1": b1, "w2": w2, "b2": b2, "w3": w3, "b3": b3}


if __name__ == "__main__":
    key = jax.random.PRNGKey(0)
    state_size = 8    # LunarLander-v2 observation dim
    action_size = 4   # LunarLander-v2 action dim

    k_params, k_state = jax.random.split(key)
    params = init_params(k_params, state_size, action_size)

    def ref_forward(s):
        h1 = jnp.maximum(s @ params["w1"] + params["b1"], 0.0)
        h2 = jnp.maximum(h1 @ params["w2"] + params["b2"], 0.0)
        return h2 @ params["w3"] + params["b3"]

    # Small batch, exact f32 path (matches PyTorch semantics within f32 tolerance).
    state_small = jax.random.normal(k_state, (8, state_size), jnp.float32)
    q_small = qnetwork_forward(state_small, params, weight_dtype=jnp.float32)
    jax.block_until_ready(q_small)
    assert q_small.shape == (8, action_size)
    assert jnp.allclose(q_small, ref_forward(state_small), atol=1e-5, rtol=1e-5)

    # Larger, non-multiple batch exercising the pipelined batch grid (>=2 steps)
    # with default bf16 weights.
    state_big = jax.random.normal(jax.random.fold_in(k_state, 1),
                                  (300, state_size), jnp.float32)
    q_big = qnetwork_forward(state_big, params)   # bf16 weights by default
    jax.block_until_ready(q_big)
    assert q_big.shape == (300, action_size)
    assert jnp.allclose(q_big, ref_forward(state_big), atol=5e-2, rtol=5e-2)

    print("KERNEL_OK")
</pallas_src>

<mosaic_0001>
module attributes {stable_mosaic.version = 11 : i64} {
  func.func @qnetwork_kernel(%arg0: i32, %arg1: memref<8x8xf32, #tpu.memory_space<vmem>>, %arg2: memref<3x128x128xf32, #tpu.memory_space<vmem>>, %arg3: memref<3x128xf32, #tpu.memory_space<vmem>>, %arg4: memref<8x4xf32, #tpu.memory_space<vmem>>) attributes {dimension_semantics = [#tpu.dimension_semantics<parallel>], iteration_bounds = array<i64: 1>, scalar_prefetch = 0 : i64, scratch_operands = 0 : i64, tpu.core_type = #tpu.core_type<tc>, window_params = [{transform_indices = @transform_0, window_bounds = array<i64: 8, 8>}, {pipeline_mode = #tpu.pipeline_mode<synchronous>, transform_indices = @transform_1, window_bounds = array<i64: 3, 128, 128>}, {pipeline_mode = #tpu.pipeline_mode<synchronous>, transform_indices = @transform_2, window_bounds = array<i64: 3, 128>}, {transform_indices = @transform_3, window_bounds = array<i64: 8, 4>}]} {
    %c0 = arith.constant 0 : index
    %c0_0 = arith.constant 0 : index
    %0 = vector.load %arg1[%c0, %c0_0] : memref<8x8xf32, #tpu.memory_space<vmem>>, vector<8x8xf32>
    %c0_1 = arith.constant 0 : index
    %c0_2 = arith.constant 0 : index
    %c0_3 = arith.constant 0 : index
    %1 = vector.load %arg2[%c0_1, %c0_2, %c0_3] : memref<3x128x128xf32, #tpu.memory_space<vmem>>, vector<1x8x128xf32>
    %2 = vector.shape_cast %1 : vector<1x8x128xf32> to vector<8x128xf32>
    %cst = arith.constant dense<0.000000e+00> : vector<8x128xf32>
    %3 = tpu.matmul %0, %2, %cst {dimension_numbers = #tpu.dot_dimension_numbers<[1], [0], [0], [1], [0, 0, 1, 1], [], []>} : vector<8x8xf32>, vector<8x128xf32>, vector<8x128xf32> -> vector<8x128xf32>
    %c0_4 = arith.constant 0 : index
    %c0_5 = arith.constant 0 : index
    %4 = vector.load %arg3[%c0_4, %c0_5] : memref<3x128xf32, #tpu.memory_space<vmem>>, vector<1x128xf32>
    %5 = vector.broadcast %4 : vector<1x128xf32> to vector<8x128xf32>
    %6 = arith.addf %3, %5 : vector<8x128xf32>
    %cst_6 = arith.constant 0.000000e+00 : f32
    %7 = vector.broadcast %cst_6 : f32 to vector<8x128xf32>
    %8 = arith.maximumf %6, %7 : vector<8x128xf32>
    %c1 = arith.constant 1 : index
    %c0_7 = arith.constant 0 : index
    %c0_8 = arith.constant 0 : index
    %9 = vector.load %arg2[%c1, %c0_7, %c0_8] : memref<3x128x128xf32, #tpu.memory_space<vmem>>, vector<1x128x128xf32>
    %10 = vector.shape_cast %9 : vector<1x128x128xf32> to vector<128x128xf32>
    %cst_9 = arith.constant dense<0.000000e+00> : vector<8x128xf32>
    %11 = tpu.matmul %8, %10, %cst_9 {dimension_numbers = #tpu.dot_dimension_numbers<[1], [0], [0], [1], [0, 0, 1, 1], [], []>} : vector<8x128xf32>, vector<128x128xf32>, vector<8x128xf32> -> vector<8x128xf32>
    %c1_10 = arith.constant 1 : index
    %c0_11 = arith.constant 0 : index
    %12 = vector.load %arg3[%c1_10, %c0_11] : memref<3x128xf32, #tpu.memory_space<vmem>>, vector<1x128xf32>
    %13 = vector.broadcast %12 : vector<1x128xf32> to vector<8x128xf32>
    %14 = arith.addf %11, %13 : vector<8x128xf32>
    %cst_12 = arith.constant 0.000000e+00 : f32
    %15 = vector.broadcast %cst_12 : f32 to vector<8x128xf32>
    %16 = arith.maximumf %14, %15 : vector<8x128xf32>
    %c2 = arith.constant 2 : index
    %c0_13 = arith.constant 0 : index
    %c0_14 = arith.constant 0 : index
    %17 = vector.load %arg2[%c2, %c0_13, %c0_14] : memref<3x128x128xf32, #tpu.memory_space<vmem>>, vector<1x128x128xf32>
    %18 = vector.shape_cast %17 : vector<1x128x128xf32> to vector<128x128xf32>
    %cst_15 = arith.constant dense<0.000000e+00> : vector<8x128xf32>
    %19 = tpu.matmul %16, %18, %cst_15 {dimension_numbers = #tpu.dot_dimension_numbers<[1], [0], [0], [1], [0, 0, 1, 1], [], []>} : vector<8x128xf32>, vector<128x128xf32>, vector<8x128xf32> -> vector<8x128xf32>
    %c2_16 = arith.constant 2 : index
    %c0_17 = arith.constant 0 : index
    %20 = vector.load %arg3[%c2_16, %c0_17] : memref<3x128xf32, #tpu.memory_space<vmem>>, vector<1x128xf32>
    %21 = vector.broadcast %20 : vector<1x128xf32> to vector<8x128xf32>
    %22 = arith.addf %19, %21 : vector<8x128xf32>
    %23 = vector.extract_strided_slice %22 {offsets = [0, 0], sizes = [8, 4], strides = [1, 1]} : vector<8x128xf32> to vector<8x4xf32>
    %c0_18 = arith.constant 0 : index
    %c0_19 = arith.constant 0 : index
    %24 = vector.load %arg4[%c0_18, %c0_19] : memref<8x4xf32, #tpu.memory_space<vmem>>, vector<8x4xf32>
    tpu.vector_store %arg4[%c0_18, %c0_19], %23 {strides = array<i32>} : memref<8x4xf32, #tpu.memory_space<vmem>>, vector<8x4xf32>,
    return
  }
  func.func @transform_0(%arg0: i32) -> (i32, i32) {
    %c0_i32 = arith.constant 0 : i32
    %c0_i32_0 = arith.constant 0 : i32
    return %arg0, %c0_i32 : i32, i32
  }
  func.func @transform_1(%arg0: i32) -> (i32, i32, i32) {
    %c0_i32 = arith.constant 0 : i32
    %c0_i32_0 = arith.constant 0 : i32
    %c0_i32_1 = arith.constant 0 : i32
    %c0_i32_2 = arith.constant 0 : i32
    return %c0_i32, %c0_i32_0, %c0_i32_1 : i32, i32, i32
  }
  func.func @transform_2(%arg0: i32) -> (i32, i32) {
    %c0_i32 = arith.constant 0 : i32
    %c0_i32_0 = arith.constant 0 : i32
    %c0_i32_1 = arith.constant 0 : i32
    return %c0_i32, %c0_i32_0 : i32, i32
  }
  func.func @transform_3(%arg0: i32) -> (i32, i32) {
    %c0_i32 = arith.constant 0 : i32
    %c0_i32_0 = arith.constant 0 : i32
    return %arg0, %c0_i32 : i32, i32
  }
}

</mosaic_0001>

<llo_original>
// kernel: tpu_custom_call.1
$region0: #{tpu_custom_call.1}
  #allocation0 [shape = 'u32[]', space=smem, size = 0x4, offset = 0x4, fixed_abs, tag = 'smem constant byte address 0x4 - core index']
  #allocation1 [shape = 'u32[144,128]{1,0:T(1,128)}', space=vmem, size = 0x12000, scoped, tag = 'internal scratch']
  %s0 = inlined_call_operand.hbm [shape: f32[8,8], index: 0, kind: input, shape index: {}]
  %s1 = inlined_call_operand.hbm [shape: f32[3,128,128], index: 1, kind: input, shape index: {}]
  %s2 = inlined_call_operand.vmem [shape: f32[3,128], index: 2, kind: input, shape index: {}]
  %s3 = inlined_call_operand.vmem [shape: f32[8,4], index: 3, kind: output, shape index: {}]
  %s4 = sld [smem:[#allocation0]]
  $region30: #{tpu_custom_call.1} parent=0
    _
  %s6 = ssub.s32 1, %s4
  %s7 = scalar_select 0, %s6, %s4
  $region1: #{tpu_custom_call.1} parent=0
    #allocation2 [shape = 'u8[4096]{0}', space=vmem, size = 0x1000, scoped, tag = 'input window, operand 0, single buffered']
    #allocation3 [shape = 's32[1]{0}', space=sflag, size = 0x4, scoped, tag = 'scoped memory for tpu_custom_call.1']
    #allocation4 [shape = 'u8[196608]{0}', space=vmem, size = 0x30000, scoped, tag = 'input window, operand 1, single buffered']
    #allocation5 [shape = 's32[1]{0}', space=sflag, size = 0x4, scoped, tag = 'scoped memory for tpu_custom_call.1']
    %8 = vsyncpa [#allocation3], 0
    %9 = vsyncpa [#allocation5], 0
    // Predicated region
    $region2: #{tpu_custom_call.1} parent=1 // pred_check
      _
    $region3: #{tpu_custom_call.1} parent=1 // pred_check_branch
      %11 = sbr.rel (0) target = $region5
    $region4: #{tpu_custom_call.1} parent=1 // pred_region
      %s13 = ssub.s32 128, 128
      %14 = vsyncadd [#allocation3], %s13
      %s16 = sshll.u32 [#allocation2], 4
      %s17 = int_to_ptr.vmem [resolvable:$true] %s16
      %19 = dma.hbm_to_vmem [thread:$0]  %s0, 128, %s17, [#allocation3]
    $region5: #{tpu_custom_call.1} parent=1 // pred_fallthru
      _
    // Predicated region
    $region6: #{tpu_custom_call.1} parent=1 // pred_check
      _
    $region7: #{tpu_custom_call.1} parent=1 // pred_check_branch
      %21 = sbr.rel (0) target = $region9
    $region8: #{tpu_custom_call.1} parent=1 // pred_region
      %s23 = ssub.s32 6144, 6144
      %24 = vsyncadd [#allocation5], %s23
      %s25 = sshll.u32 [#allocation4], 4
      %s26 = int_to_ptr.vmem [resolvable:$true] %s25
      %31 = dma.hbm_to_vmem [thread:$0]  %s1, 6144, %s26, [#allocation5], 128, 128, 8
    $region9: #{tpu_custom_call.1} parent=1 // pred_fallthru
      _
    // Predicated region
    $region10: #{tpu_custom_call.1} parent=1 // pred_check
      _
    $region11: #{tpu_custom_call.1} parent=1 // pred_check_branch
      %33 = sbr.rel (0) target = $region13
    $region12: #{tpu_custom_call.1} parent=1 // pred_region
      _
    $region13: #{tpu_custom_call.1} parent=1 // pred_fallthru
      _
    // Predicated region
    $region14: #{tpu_custom_call.1} parent=1 // pred_check
      _
    $region15: #{tpu_custom_call.1} parent=1 // pred_check_branch
      %35 = sbr.rel (0) target = $region17
    $region16: #{tpu_custom_call.1} parent=1 // pred_region
      %36 = dma.done [#allocation3], 128
    $region17: #{tpu_custom_call.1} parent=1 // pred_fallthru
      _
    // Predicated region
    $region18: #{tpu_custom_call.1} parent=1 // pred_check
      _
    $region19: #{tpu_custom_call.1} parent=1 // pred_check_branch
      %38 = sbr.rel (0) target = $region21
    $region20: #{tpu_custom_call.1} parent=1 // pred_region
      %39 = dma.done [#allocation5], 6144
    $region21: #{tpu_custom_call.1} parent=1 // pred_fallthru
      _
    %v40 = vld [vmem:[#allocation2] sm:$0xff]
    %v41 = vld [vmem:[#allocation4] sm:$0xff]
    %v42 = vld [vmem:[%s2] sm:$0x1]
    %v43 = vlaneseq
    %v44 = vshrl.u32 %v43, 7
    %v45 = vsub.s32 0, %v44
    %v46 = vrot.slane %v42, %v45
    %vm47 = vcmask 64512
    %v49 = vsel %vm47, %v40, 0
    %51 = vmatprep.subr.mxu0 0.0
    %52 = vmatpush1.msra.mxu0 %v41
    %53 = vmatprep.subr.mxu0 0.0
    %54 = vmatpush1.msra.mxu0 0.0
    %55 = vmatprep.subr.mxu0 0.0
    %56 = vmatpush1.msra.mxu0 0.0
    %57 = vmatprep.subr.mxu0 0.0
    %58 = vmatpush1.msra.mxu0 0.0
    %59 = vmatprep.subr.mxu0 0.0
    %60 = vmatpush1.msra.mxu0 0.0
    %61 = vmatprep.subr.mxu0 0.0
    %62 = vmatpush1.msra.mxu0 0.0
    %63 = vmatprep.subr.mxu0 0.0
    %64 = vmatpush1.msra.mxu0 0.0
    %65 = vmatprep.subr.mxu0 0.0
    %66 = vmatpush1.msra.mxu0 0.0
    %67 = vmatprep.subr.mxu0 0.0
    %68 = vmatpush1.msra.mxu0 0.0
    %69 = vmatprep.subr.mxu0 0.0
    %70 = vmatpush1.msra.mxu0 0.0
    %71 = vmatprep.subr.mxu0 0.0
    %72 = vmatpush1.msra.mxu0 0.0
    %73 = vmatprep.subr.mxu0 0.0
    %74 = vmatpush1.msra.mxu0 0.0
    %75 = vmatprep.subr.mxu0 0.0
    %76 = vmatpush1.msra.mxu0 0.0
    %77 = vmatprep.subr.mxu0 0.0
    %78 = vmatpush1.msra.mxu0 0.0
    %79 = vmatprep.subr.mxu0 0.0
    %80 = vmatpush1.msra.mxu0 0.0
    %81 = vmatprep.subr.mxu0 0.0
    %82 = vmatpush1.msra.mxu0 0.0
    %83 = vmatprep.subr.mxu0 0.0
    %84 = vmatpush1.msra.mxu0 0.0
    %85 = vmatprep.subr.mxu0 0.0
    %86 = vmatpush1.msra.mxu0 0.0
    %87 = vmatprep.subr.mxu0 0.0
    %88 = vmatpush1.msra.mxu0 0.0
    %89 = vmatprep.subr.mxu0 0.0
    %90 = vmatpush1.msra.mxu0 0.0
    %91 = vmatprep.subr.mxu0 0.0
    %92 = vmatpush1.msra.mxu0 0.0
    %93 = vmatprep.subr.mxu0 0.0
    %94 = vmatpush1.msra.mxu0 0.0
    %95 = vmatprep.subr.mxu0 0.0
    %96 = vmatpush1.msra.mxu0 0.0
    %97 = vmatprep.subr.mxu0 0.0
    %98 = vmatpush1.msra.mxu0 0.0
    %99 = vmatprep.subr.mxu0 0.0
    %100 = vmatpush1.msra.mxu0 0.0
    %101 = vmatprep.subr.mxu0 0.0
    %102 = vmatpush1.msra.mxu0 0.0
    %103 = vmatprep.subr.mxu0 0.0
    %104 = vmatpush1.msra.mxu0 0.0
    %105 = vmatprep.subr.mxu0 0.0
    %106 = vmatpush1.msra.mxu0 0.0
    %107 = vmatprep.subr.mxu0 0.0
    %108 = vmatpush1.msra.mxu0 0.0
    %109 = vmatprep.subr.mxu0 0.0
    %110 = vmatpush1.msra.mxu0 0.0
    %111 = vmatprep.subr.mxu0 0.0
    %112 = vmatpush1.msra.mxu0 0.0
    %113 = vmatprep.subr.mxu0 0.0
    %114 = vmatpush1.msra.mxu0 0.0
    %115 = vmatprep.mubr.f32.mxu0 0.0
    %116 = vmatmul.mubr.f32.gmra.mrb[0].mxu0 %v49
    %v117 = vpop.f32.mrb[0].mxu0
    %v118 = vadd.f32 %v46, %v117
    %v119 = vpop.f32.mrb[0].mxu0
    %120 = vdwg.mxu0
    %v121 = vmax.f32 %v118, 0.0
    %s122 = scalar_lea.vmem [#allocation4], 128
    %v123 = vld [vmem:[%s122] sm:$0xff]
    %v124 = vld [vmem:[%s122 + $0x8] sm:$0xff]
    %v125 = vld [vmem:[%s122 + $0x10] sm:$0xff]
    %v126 = vld [vmem:[%s122 + $0x18] sm:$0xff]
    %v127 = vld [vmem:[%s122 + $0x20] sm:$0xff]
    %v128 = vld [vmem:[%s122 + $0x28] sm:$0xff]
    %v129 = vld [vmem:[%s122 + $0x30] sm:$0xff]
    %v130 = vld [vmem:[%s122 + $0x38] sm:$0xff]
    %v131 = vld [vmem:[%s122 + $0x40] sm:$0xff]
    %v132 = vld [vmem:[%s122 + $0x48] sm:$0xff]
    %v133 = vld [vmem:[%s122 + $0x50] sm:$0xff]
    %v134 = vld [vmem:[%s122 + $0x58] sm:$0xff]
    %v135 = vld [vmem:[%s122 + $0x60] sm:$0xff]
    %v136 = vld [vmem:[%s122 + $0x68] sm:$0xff]
    %v137 = vld [vmem:[%s122 + $0x70] sm:$0xff]
    %v138 = vld [vmem:[%s122 + $0x78] sm:$0xff]
    %v139 = vld [vmem:[%s2 + $0x1] sm:$0x1]
    %v140 = vlaneseq
    %v141 = vshrl.u32 %v140, 7
    %v142 = vsub.s32 0, %v141
    %v143 = vrot.slane %v139, %v142
    %144 = vmatprep.subr.mxu0 0.0
    %145 = vmatpush1.msra.mxu0 %v123
    %146 = vmatprep.subr.mxu0 0.0
    %147 = vmatpush1.msra.mxu0 %v124
    %148 = vmatprep.subr.mxu0 0.0
    %149 = vmatpush1.msra.mxu0 %v125
    %150 = vmatprep.subr.mxu0 0.0
    %151 = vmatpush1.msra.mxu0 %v126
    %152 = vmatprep.subr.mxu0 0.0
    %153 = vmatpush1.msra.mxu0 %v127
    %154 = vmatprep.subr.mxu0 0.0
    %155 = vmatpush1.msra.mxu0 %v128
    %156 = vmatprep.subr.mxu0 0.0
    %157 = vmatpush1.msra.mxu0 %v129
    %158 = vmatprep.subr.mxu0 0.0
    %159 = vmatpush1.msra.mxu0 %v130
    %160 = vmatprep.subr.mxu0 0.0
    %161 = vmatpush1.msra.mxu0 %v131
    %162 = vmatprep.subr.mxu0 0.0
    %163 = vmatpush1.msra.mxu0 %v132
    %164 = vmatprep.subr.mxu0 0.0
    %165 = vmatpush1.msra.mxu0 %v133
    %166 = vmatprep.subr.mxu0 0.0
    %167 = vmatpush1.msra.mxu0 %v134
    %168 = vmatprep.subr.mxu0 0.0
    %169 = vmatpush1.msra.mxu0 %v135
    %170 = vmatprep.subr.mxu0 0.0
    %171 = vmatpush1.msra.mxu0 %v136
    %172 = vmatprep.subr.mxu0 0.0
    %173 = vmatpush1.msra.mxu0 %v137
    %174 = vmatprep.subr.mxu0 0.0
    %175 = vmatpush1.msra.mxu0 %v138
    %176 = vmatprep.subr.mxu0 0.0
    %177 = vmatpush1.msra.mxu0 0.0
    %178 = vmatprep.subr.mxu0 0.0
    %179 = vmatpush1.msra.mxu0 0.0
    %180 = vmatprep.subr.mxu0 0.0
    %181 = vmatpush1.msra.mxu0 0.0
    %182 = vmatprep.subr.mxu0 0.0
    %183 = vmatpush1.msra.mxu0 0.0
    %184 = vmatprep.subr.mxu0 0.0
    %185 = vmatpush1.msra.mxu0 0.0
    %186 = vmatprep.subr.mxu0 0.0
    %187 = vmatpush1.msra.mxu0 0.0
    %188 = vmatprep.subr.mxu0 0.0
    %189 = vmatpush1.msra.mxu0 0.0
    %190 = vmatprep.subr.mxu0 0.0
    %191 = vmatpush1.msra.mxu0 0.0
    %192 = vmatprep.subr.mxu0 0.0
    %193 = vmatpush1.msra.mxu0 0.0
    %194 = vmatprep.subr.mxu0 0.0
    %195 = vmatpush1.msra.mxu0 0.0
    %196 = vmatprep.subr.mxu0 0.0
    %197 = vmatpush1.msra.mxu0 0.0
    %198 = vmatprep.subr.mxu0 0.0
    %199 = vmatpush1.msra.mxu0 0.0
    %200 = vmatprep.subr.mxu0 0.0
    %201 = vmatpush1.msra.mxu0 0.0
    %202 = vmatprep.subr.mxu0 0.0
    %203 = vmatpush1.msra.mxu0 0.0
    %204 = vmatprep.subr.mxu0 0.0
    %205 = vmatpush1.msra.mxu0 0.0
    %206 = vmatprep.subr.mxu0 0.0
    %207 = vmatpush1.msra.mxu0 0.0
    %208 = vmatprep.mubr.f32.mxu0 0.0
    %209 = vmatmul.mubr.f32.gmra.mrb[0].mxu0 %v121
    %v210 = vpop.f32.mrb[0].mxu0
    %v211 = vadd.f32 %v143, %v210
    %v212 = vpop.f32.mrb[0].mxu0
    %213 = vdwg.mxu0
    %v214 = vmax.f32 %v211, 0.0
    %s215 = scalar_lea.vmem [#allocation4], 256
    %v216 = vld [vmem:[%s215] sm:$0xff]
    %v217 = vld [vmem:[%s215 + $0x8] sm:$0xff]
    %v218 = vld [vmem:[%s215 + $0x10] sm:$0xff]
    %v219 = vld [vmem:[%s215 + $0x18] sm:$0xff]
    %v220 = vld [vmem:[%s215 + $0x20] sm:$0xff]
    %v221 = vld [vmem:[%s215 + $0x28] sm:$0xff]
    %v222 = vld [vmem:[%s215 + $0x30] sm:$0xff]
    %v223 = vld [vmem:[%s215 + $0x38] sm:$0xff]
    %v224 = vld [vmem:[%s215 + $0x40] sm:$0xff]
    %v225 = vld [vmem:[%s215 + $0x48] sm:$0xff]
    %v226 = vld [vmem:[%s215 + $0x50] sm:$0xff]
    %v227 = vld [vmem:[%s215 + $0x58] sm:$0xff]
    %v228 = vld [vmem:[%s215 + $0x60] sm:$0xff]
    %v229 = vld [vmem:[%s215 + $0x68] sm:$0xff]
    %v230 = vld [vmem:[%s215 + $0x70] sm:$0xff]
    %v231 = vld [vmem:[%s215 + $0x78] sm:$0xff]
    %v232 = vld [vmem:[%s2 + $0x2] sm:$0x1]
    %v233 = vlaneseq
    %v234 = vshrl.u32 %v233, 7
    %v235 = vsub.s32 0, %v234
    %v236 = vrot.slane %v232, %v235
    %237 = vmatprep.subr.mxu0 0.0
    %238 = vmatpush1.msra.mxu0 %v216
    %239 = vmatprep.subr.mxu0 0.0
    %240 = vmatpush1.msra.mxu0 %v217
    %241 = vmatprep.subr.mxu0 0.0
    %242 = vmatpush1.msra.mxu0 %v218
    %243 = vmatprep.subr.mxu0 0.0
    %244 = vmatpush1.msra.mxu0 %v219
    %245 = vmatprep.subr.mxu0 0.0
    %246 = vmatpush1.msra.mxu0 %v220
    %247 = vmatprep.subr.mxu0 0.0
    %248 = vmatpush1.msra.mxu0 %v221
    %249 = vmatprep.subr.mxu0 0.0
    %250 = vmatpush1.msra.mxu0 %v222
    %251 = vmatprep.subr.mxu0 0.0
    %252 = vmatpush1.msra.mxu0 %v223
    %253 = vmatprep.subr.mxu0 0.0
    %254 = vmatpush1.msra.mxu0 %v224
    %255 = vmatprep.subr.mxu0 0.0
    %256 = vmatpush1.msra.mxu0 %v225
    %257 = vmatprep.subr.mxu0 0.0
    %258 = vmatpush1.msra.mxu0 %v226
    %259 = vmatprep.subr.mxu0 0.0
    %260 = vmatpush1.msra.mxu0 %v227
    %261 = vmatprep.subr.mxu0 0.0
    %262 = vmatpush1.msra.mxu0 %v228
    %263 = vmatprep.subr.mxu0 0.0
    %264 = vmatpush1.msra.mxu0 %v229
    %265 = vmatprep.subr.mxu0 0.0
    %266 = vmatpush1.msra.mxu0 %v230
    %267 = vmatprep.subr.mxu0 0.0
    %268 = vmatpush1.msra.mxu0 %v231
    %269 = vmatprep.subr.mxu0 0.0
    %270 = vmatpush1.msra.mxu0 0.0
    %271 = vmatprep.subr.mxu0 0.0
    %272 = vmatpush1.msra.mxu0 0.0
    %273 = vmatprep.subr.mxu0 0.0
    %274 = vmatpush1.msra.mxu0 0.0
    %275 = vmatprep.subr.mxu0 0.0
    %276 = vmatpush1.msra.mxu0 0.0
    %277 = vmatprep.subr.mxu0 0.0
    %278 = vmatpush1.msra.mxu0 0.0
    %279 = vmatprep.subr.mxu0 0.0
    %280 = vmatpush1.msra.mxu0 0.0
    %281 = vmatprep.subr.mxu0 0.0
    %282 = vmatpush1.msra.mxu0 0.0
    %283 = vmatprep.subr.mxu0 0.0
    %284 = vmatpush1.msra.mxu0 0.0
    %285 = vmatprep.subr.mxu0 0.0
    %286 = vmatpush1.msra.mxu0 0.0
    %287 = vmatprep.subr.mxu0 0.0
    %288 = vmatpush1.msra.mxu0 0.0
    %289 = vmatprep.subr.mxu0 0.0
    %290 = vmatpush1.msra.mxu0 0.0
    %291 = vmatprep.subr.mxu0 0.0
    %292 = vmatpush1.msra.mxu0 0.0
    %293 = vmatprep.subr.mxu0 0.0
    %294 = vmatpush1.msra.mxu0 0.0
    %295 = vmatprep.subr.mxu0 0.0
    %296 = vmatpush1.msra.mxu0 0.0
    %297 = vmatprep.subr.mxu0 0.0
    %298 = vmatpush1.msra.mxu0 0.0
    %299 = vmatprep.subr.mxu0 0.0
    %300 = vmatpush1.msra.mxu0 0.0
    %301 = vmatprep.mubr.f32.mxu0 0.0
    %302 = vmatmul.mubr.f32.gmra.mrb[0].mxu0 %v214
    %v303 = vpop.f32.mrb[0].mxu0
    %v304 = vadd.f32 %v236, %v303
    %v305 = vpop.f32.mrb[0].mxu0
    %306 = vdwg.mxu0
    %vm307 = vcmask 31744
    %308 = vst.msk [vmem:[%s3] sm:$0xff] %vm307, %v304
    // Predicated region
    $region22: #{tpu_custom_call.1} parent=1 // pred_check
      _
    $region23: #{tpu_custom_call.1} parent=1 // pred_check_branch
      %310 = sbr.rel (0) target = $region25
    $region24: #{tpu_custom_call.1} parent=1 // pred_region
      _
    $region25: #{tpu_custom_call.1} parent=1 // pred_fallthru
      _
    // Predicated region
    $region26: #{tpu_custom_call.1} parent=1 // pred_check
      _
    $region27: #{tpu_custom_call.1} parent=1 // pred_check_branch
      %312 = sbr.rel (0) target = $region29
    $region28: #{tpu_custom_call.1} parent=1 // pred_region
      _
    $region29: #{tpu_custom_call.1} parent=1 // pred_fallthru
      _
    %313 = vsyncpa [#allocation3], 1
    %314 = vsyncpa [#allocation5], 1

</llo_original>
